<compile_context>
chip_gen: v7x
topology: tpu7x:2x2x1
jax: 0.10.0
libtpu: 0.0.40
codegen_flags: <defaults>
</compile_context>

<pallas_src>
import numpy as np
import jax
import jax.numpy as jnp
from jax.experimental import pallas as pl
from jax.experimental.pallas import tpu as pltpu


def fused_bottleneck_kernel(x_ref, w1_ref, b1_ref, w2_ref, b2_ref, o_ref,
                            xpad_ref, hpad_ref):
    """Fused conv3x3(same)+ReLU -> conv3x3(same)+ReLU for one batch element.

    x_ref : (1, H, W*Cin)        input, NHWC with (W, Cin) flattened into lanes
    w1_ref: (3, W*Cin, W*Cout)   conv1 banded weight slabs (one per ky), bf16
    b1_ref: (1, W*Cout)          conv1 bias tiled over W, f32
    w2_ref: (3, W*Cout, W*Cout)  conv2 banded weight slabs, bf16
    b2_ref: (1, W*Cout)          conv2 bias tiled over W, f32
    o_ref : (1, H, W*Cout)       output, NHWC with (W, Cout) flattened
    xpad_ref: VMEM (H+2, W*Cin)  f32 scratch, zero halo rows at 0 and H+1
    hpad_ref: VMEM (H+2, W*Cout) f32 scratch holding the intermediate in VMEM
    """
    H = o_ref.shape[1]
    WCin = x_ref.shape[2]
    WCout = o_ref.shape[2]

    # ---- conv1: stage input with a zeroed 1-row halo (height "same" pad). ----
    xpad_ref[...] = jnp.zeros((H + 2, WCin), jnp.float32)
    xpad_ref[1:H + 1, :] = x_ref[0]

    acc = jnp.zeros((H, WCout), jnp.float32)
    for ky in range(3):  # row shifts only; all dx taps live inside the slab
        lhs = xpad_ref[ky:ky + H, :].astype(jnp.bfloat16)
        acc = acc + jnp.dot(lhs, w1_ref[ky],
                            preferred_element_type=jnp.float32)
    h = jnp.maximum(acc + b1_ref[...], 0.0)          # (H, W*Cout), f32

    # ---- conv2: intermediate stays in VMEM, same structure. ----
    hpad_ref[...] = jnp.zeros((H + 2, WCout), jnp.float32)
    hpad_ref[1:H + 1, :] = h

    acc2 = jnp.zeros((H, WCout), jnp.float32)
    for ky in range(3):
        lhs = hpad_ref[ky:ky + H, :].astype(jnp.bfloat16)
        acc2 = acc2 + jnp.dot(lhs, w2_ref[ky],
                              preferred_element_type=jnp.float32)
    y = jnp.maximum(acc2 + b2_ref[...], 0.0)
    o_ref[0] = y.astype(o_ref.dtype)


def init_bottleneck_params(key, in_channels, out_channels):
    """Deterministic init matching nn.Conv2d shapes (OIHW + bias)."""
    k1, k2, k3, k4 = jax.random.split(key, 4)
    s1 = 1.0 / np.sqrt(in_channels * 9)
    s2 = 1.0 / np.sqrt(out_channels * 9)
    w1 = jax.random.uniform(k1, (out_channels, in_channels, 3, 3),
                            jnp.float32, -s1, s1)
    b1 = jax.random.uniform(k2, (out_channels,), jnp.float32, -s1, s1)
    w2 = jax.random.uniform(k3, (out_channels, out_channels, 3, 3),
                            jnp.float32, -s2, s2)
    b2 = jax.random.uniform(k4, (out_channels,), jnp.float32, -s2, s2)
    return (w1, b1, w2, b2)


def pack_bottleneck_params(params, W):
    """One-time host-side packing: OIHW conv weights -> banded bf16 slabs.

    For kernel row ky, M_ky[(wp*Ci + ci), (w*Co + co)] = W_hwio[ky, wp-w+1, ci, co]
    when wp - w in {-1, 0, +1}, else 0.  A single matmul of the row-shifted
    activation slab against M_ky applies all three dx taps, with "same" width
    padding built in (out-of-range taps are simply absent from the band).
    """
    w1_oihw, b1, w2_oihw, b2 = params

    def banded(w_oihw):
        w_hwio = np.transpose(np.asarray(w_oihw), (2, 3, 1, 0))  # (3,3,Ci,Co)
        ci, co = w_hwio.shape[2], w_hwio.shape[3]
        m = np.zeros((3, W * ci, W * co), np.float32)
        for ky in range(3):
            for w in range(W):
                for kx in range(3):
                    wp = w + kx - 1
                    if 0 <= wp < W:
                        m[ky, wp * ci:(wp + 1) * ci,
                          w * co:(w + 1) * co] = w_hwio[ky, kx]
        return jnp.asarray(m, jnp.bfloat16)

    cout = int(np.asarray(b1).shape[0])
    b1t = jnp.asarray(np.tile(np.asarray(b1), W).reshape(1, W * cout), jnp.float32)
    b2t = jnp.asarray(np.tile(np.asarray(b2), W).reshape(1, W * cout), jnp.float32)
    return (banded(w1_oihw), b1t, banded(w2_oihw), b2t)


def bottleneck_block(x_nchw, packed_params):
    """Forward pass matching BottleneckBlock.forward (input/output NCHW)."""
    w1b, b1t, w2b, b2t = packed_params
    B, Cin, H, W = x_nchw.shape
    Cout = w1b.shape[2] // W
    assert w1b.shape == (3, W * Cin, W * Cout)

    # NCHW -> NHWC, flatten (W, C) into the lane dimension (lane-dense I/O).
    x2d = jnp.transpose(x_nchw, (0, 2, 3, 1)).reshape(B, H, W * Cin)

    out2d = pl.pallas_call(
        fused_bottleneck_kernel,
        out_shape=jax.ShapeDtypeStruct((B, H, W * Cout), x_nchw.dtype),
        grid_spec=pltpu.PrefetchScalarGridSpec(
            num_scalar_prefetch=0,
            grid=(B,),
            in_specs=[
                pl.BlockSpec((1, H, W * Cin), lambda b: (b, 0, 0)),
                pl.BlockSpec((3, W * Cin, W * Cout), lambda b: (0, 0, 0)),
                pl.BlockSpec((1, W * Cout), lambda b: (0, 0)),
                pl.BlockSpec((3, W * Cout, W * Cout), lambda b: (0, 0, 0)),
                pl.BlockSpec((1, W * Cout), lambda b: (0, 0)),
            ],
            out_specs=pl.BlockSpec((1, H, W * Cout), lambda b: (b, 0, 0)),
            scratch_shapes=[
                pltpu.VMEM((H + 2, W * Cin), jnp.float32),
                pltpu.VMEM((H + 2, W * Cout), jnp.float32),
            ],
        ),
        compiler_params=pltpu.CompilerParams(
            dimension_semantics=("parallel",)),
    )(x2d, w1b, b1t, w2b, b2t)

    return jnp.transpose(out2d.reshape(B, H, W, Cout), (0, 3, 1, 2))  # NCHW


def bottleneck_block_ref(x_nchw, params):
    """Pure-JAX f32 reference (lax conv) for correctness check."""
    w1_oihw, b1, w2_oihw, b2 = params
    dn = jax.lax.conv_dimension_numbers(x_nchw.shape, w1_oihw.shape,
                                        ("NCHW", "OIHW", "NCHW"))
    h = jax.lax.conv_general_dilated(x_nchw, w1_oihw, (1, 1), "SAME",
                                     dimension_numbers=dn)
    h = jnp.maximum(h + b1[None, :, None, None], 0.0)
    dn2 = jax.lax.conv_dimension_numbers(h.shape, w2_oihw.shape,
                                         ("NCHW", "OIHW", "NCHW"))
    y = jax.lax.conv_general_dilated(h, w2_oihw, (1, 1), "SAME",
                                     dimension_numbers=dn2)
    return jnp.maximum(y + b2[None, :, None, None], 0.0)


if __name__ == "__main__":
    key = jax.random.PRNGKey(0)
    kx, kp = jax.random.split(key)

    B, Cin, Cout, H, W = 2, 4, 8, 16, 16
    x = jax.random.normal(kx, (B, Cin, H, W), jnp.float32)
    params = init_bottleneck_params(kp, Cin, Cout)
    packed = pack_bottleneck_params(params, W)   # one-time weight preparation

    out = jax.block_until_ready(bottleneck_block(x, packed))
    ref = jax.block_until_ready(bottleneck_block_ref(x, params))

    assert out.shape == (B, Cout, H, W)
    # bf16 MXU operands with f32 accumulation -> looser tolerance than pure f32.
    np.testing.assert_allclose(np.asarray(out), np.asarray(ref),
                               rtol=2e-2, atol=2e-2)
    print("KERNEL_OK")
</pallas_src>

<mosaic_0001>
module attributes {stable_mosaic.version = 11 : i64} {
  func.func @fused_bottleneck_kernel(%arg0: i32, %arg1: memref<1x16x64xf32, #tpu.memory_space<vmem>>, %arg2: memref<3x64x128xbf16, #tpu.memory_space<vmem>>, %arg3: memref<1x128xf32, #tpu.memory_space<vmem>>, %arg4: memref<3x128x128xbf16, #tpu.memory_space<vmem>>, %arg5: memref<1x128xf32, #tpu.memory_space<vmem>>, %arg6: memref<1x16x128xf32, #tpu.memory_space<vmem>>, %arg7: memref<18x64xf32, #tpu.memory_space<vmem>>, %arg8: memref<18x128xf32, #tpu.memory_space<vmem>>) attributes {dimension_semantics = [#tpu.dimension_semantics<parallel>], iteration_bounds = array<i64: 2>, scalar_prefetch = 0 : i64, scratch_operands = 2 : i64, tpu.core_type = #tpu.core_type<tc>, window_params = [{transform_indices = @transform_0, window_bounds = array<i64: 1, 16, 64>}, {pipeline_mode = #tpu.pipeline_mode<synchronous>, transform_indices = @transform_1, window_bounds = array<i64: 3, 64, 128>}, {pipeline_mode = #tpu.pipeline_mode<synchronous>, transform_indices = @transform_2, window_bounds = array<i64: 1, 128>}, {pipeline_mode = #tpu.pipeline_mode<synchronous>, transform_indices = @transform_3, window_bounds = array<i64: 3, 128, 128>}, {pipeline_mode = #tpu.pipeline_mode<synchronous>, transform_indices = @transform_4, window_bounds = array<i64: 1, 128>}, {transform_indices = @transform_5, window_bounds = array<i64: 1, 16, 128>}]} {
    %cst = arith.constant 0.000000e+00 : f32
    %0 = vector.broadcast %cst : f32 to vector<18x64xf32>
    %c0 = arith.constant 0 : index
    %c0_0 = arith.constant 0 : index
    %1 = vector.load %arg7[%c0, %c0_0] : memref<18x64xf32, #tpu.memory_space<vmem>>, vector<18x64xf32>
    tpu.vector_store %arg7[%c0, %c0_0], %0 {strides = array<i32>} : memref<18x64xf32, #tpu.memory_space<vmem>>, vector<18x64xf32>,
    %c0_1 = arith.constant 0 : index
    %c0_2 = arith.constant 0 : index
    %c0_3 = arith.constant 0 : index
    %2 = vector.load %arg1[%c0_1, %c0_2, %c0_3] : memref<1x16x64xf32, #tpu.memory_space<vmem>>, vector<1x16x64xf32>
    %3 = vector.shape_cast %2 : vector<1x16x64xf32> to vector<16x64xf32>
    %c1 = arith.constant 1 : index
    %c0_4 = arith.constant 0 : index
    %4 = vector.load %arg7[%c1, %c0_4] : memref<18x64xf32, #tpu.memory_space<vmem>>, vector<16x64xf32>
    tpu.vector_store %arg7[%c1, %c0_4], %3 {strides = array<i32>} : memref<18x64xf32, #tpu.memory_space<vmem>>, vector<16x64xf32>,
    %cst_5 = arith.constant 0.000000e+00 : f32
    %5 = vector.broadcast %cst_5 : f32 to vector<16x128xf32>
    %c0_6 = arith.constant 0 : index
    %c0_7 = arith.constant 0 : index
    %6 = vector.load %arg7[%c0_6, %c0_7] : memref<18x64xf32, #tpu.memory_space<vmem>>, vector<16x64xf32>
    %7 = arith.truncf %6 : vector<16x64xf32> to vector<16x64xbf16>
    %c0_8 = arith.constant 0 : index
    %c0_9 = arith.constant 0 : index
    %c0_10 = arith.constant 0 : index
    %8 = vector.load %arg2[%c0_8, %c0_9, %c0_10] : memref<3x64x128xbf16, #tpu.memory_space<vmem>>, vector<1x64x128xbf16>
    %9 = vector.shape_cast %8 : vector<1x64x128xbf16> to vector<64x128xbf16>
    %cst_11 = arith.constant dense<0.000000e+00> : vector<16x128xf32>
    %10 = tpu.matmul %7, %9, %cst_11 {dimension_numbers = #tpu.dot_dimension_numbers<[1], [0], [0], [1], [0, 0, 1, 1], [], []>} : vector<16x64xbf16>, vector<64x128xbf16>, vector<16x128xf32> -> vector<16x128xf32>
    %11 = arith.addf %5, %10 : vector<16x128xf32>
    %c1_12 = arith.constant 1 : index
    %c0_13 = arith.constant 0 : index
    %12 = vector.load %arg7[%c1_12, %c0_13] : memref<18x64xf32, #tpu.memory_space<vmem>>, vector<16x64xf32>
    %13 = arith.truncf %12 : vector<16x64xf32> to vector<16x64xbf16>
    %c1_14 = arith.constant 1 : index
    %c0_15 = arith.constant 0 : index
    %c0_16 = arith.constant 0 : index
    %14 = vector.load %arg2[%c1_14, %c0_15, %c0_16] : memref<3x64x128xbf16, #tpu.memory_space<vmem>>, vector<1x64x128xbf16>
    %15 = vector.shape_cast %14 : vector<1x64x128xbf16> to vector<64x128xbf16>
    %cst_17 = arith.constant dense<0.000000e+00> : vector<16x128xf32>
    %16 = tpu.matmul %13, %15, %cst_17 {dimension_numbers = #tpu.dot_dimension_numbers<[1], [0], [0], [1], [0, 0, 1, 1], [], []>} : vector<16x64xbf16>, vector<64x128xbf16>, vector<16x128xf32> -> vector<16x128xf32>
    %17 = arith.addf %11, %16 : vector<16x128xf32>
    %c2 = arith.constant 2 : index
    %c0_18 = arith.constant 0 : index
    %18 = vector.load %arg7[%c2, %c0_18] : memref<18x64xf32, #tpu.memory_space<vmem>>, vector<16x64xf32>
    %19 = arith.truncf %18 : vector<16x64xf32> to vector<16x64xbf16>
    %c2_19 = arith.constant 2 : index
    %c0_20 = arith.constant 0 : index
    %c0_21 = arith.constant 0 : index
    %20 = vector.load %arg2[%c2_19, %c0_20, %c0_21] : memref<3x64x128xbf16, #tpu.memory_space<vmem>>, vector<1x64x128xbf16>
    %21 = vector.shape_cast %20 : vector<1x64x128xbf16> to vector<64x128xbf16>
    %cst_22 = arith.constant dense<0.000000e+00> : vector<16x128xf32>
    %22 = tpu.matmul %19, %21, %cst_22 {dimension_numbers = #tpu.dot_dimension_numbers<[1], [0], [0], [1], [0, 0, 1, 1], [], []>} : vector<16x64xbf16>, vector<64x128xbf16>, vector<16x128xf32> -> vector<16x128xf32>
    %23 = arith.addf %17, %22 : vector<16x128xf32>
    %c0_23 = arith.constant 0 : index
    %c0_24 = arith.constant 0 : index
    %24 = vector.load %arg3[%c0_23, %c0_24] : memref<1x128xf32, #tpu.memory_space<vmem>>, vector<1x128xf32>
    %25 = vector.broadcast %24 : vector<1x128xf32> to vector<16x128xf32>
    %26 = arith.addf %23, %25 : vector<16x128xf32>
    %cst_25 = arith.constant 0.000000e+00 : f32
    %27 = vector.broadcast %cst_25 : f32 to vector<16x128xf32>
    %28 = arith.maximumf %26, %27 : vector<16x128xf32>
    %cst_26 = arith.constant 0.000000e+00 : f32
    %29 = vector.broadcast %cst_26 : f32 to vector<18x128xf32>
    %c0_27 = arith.constant 0 : index
    %c0_28 = arith.constant 0 : index
    %30 = vector.load %arg8[%c0_27, %c0_28] : memref<18x128xf32, #tpu.memory_space<vmem>>, vector<18x128xf32>
    tpu.vector_store %arg8[%c0_27, %c0_28], %29 {strides = array<i32>} : memref<18x128xf32, #tpu.memory_space<vmem>>, vector<18x128xf32>,
    %c1_29 = arith.constant 1 : index
    %c0_30 = arith.constant 0 : index
    %31 = vector.load %arg8[%c1_29, %c0_30] : memref<18x128xf32, #tpu.memory_space<vmem>>, vector<16x128xf32>
    tpu.vector_store %arg8[%c1_29, %c0_30], %28 {strides = array<i32>} : memref<18x128xf32, #tpu.memory_space<vmem>>, vector<16x128xf32>,
    %cst_31 = arith.constant 0.000000e+00 : f32
    %32 = vector.broadcast %cst_31 : f32 to vector<16x128xf32>
    %c0_32 = arith.constant 0 : index
    %c0_33 = arith.constant 0 : index
    %33 = vector.load %arg8[%c0_32, %c0_33] : memref<18x128xf32, #tpu.memory_space<vmem>>, vector<16x128xf32>
    %34 = arith.truncf %33 : vector<16x128xf32> to vector<16x128xbf16>
    %c0_34 = arith.constant 0 : index
    %c0_35 = arith.constant 0 : index
    %c0_36 = arith.constant 0 : index
    %35 = vector.load %arg4[%c0_34, %c0_35, %c0_36] : memref<3x128x128xbf16, #tpu.memory_space<vmem>>, vector<1x128x128xbf16>
    %36 = vector.shape_cast %35 : vector<1x128x128xbf16> to vector<128x128xbf16>
    %cst_37 = arith.constant dense<0.000000e+00> : vector<16x128xf32>
    %37 = tpu.matmul %34, %36, %cst_37 {dimension_numbers = #tpu.dot_dimension_numbers<[1], [0], [0], [1], [0, 0, 1, 1], [], []>} : vector<16x128xbf16>, vector<128x128xbf16>, vector<16x128xf32> -> vector<16x128xf32>
    %38 = arith.addf %32, %37 : vector<16x128xf32>
    %c1_38 = arith.constant 1 : index
    %c0_39 = arith.constant 0 : index
    %39 = vector.load %arg8[%c1_38, %c0_39] : memref<18x128xf32, #tpu.memory_space<vmem>>, vector<16x128xf32>
    %40 = arith.truncf %39 : vector<16x128xf32> to vector<16x128xbf16>
    %c1_40 = arith.constant 1 : index
    %c0_41 = arith.constant 0 : index
    %c0_42 = arith.constant 0 : index
    %41 = vector.load %arg4[%c1_40, %c0_41, %c0_42] : memref<3x128x128xbf16, #tpu.memory_space<vmem>>, vector<1x128x128xbf16>
    %42 = vector.shape_cast %41 : vector<1x128x128xbf16> to vector<128x128xbf16>
    %cst_43 = arith.constant dense<0.000000e+00> : vector<16x128xf32>
    %43 = tpu.matmul %40, %42, %cst_43 {dimension_numbers = #tpu.dot_dimension_numbers<[1], [0], [0], [1], [0, 0, 1, 1], [], []>} : vector<16x128xbf16>, vector<128x128xbf16>, vector<16x128xf32> -> vector<16x128xf32>
    %44 = arith.addf %38, %43 : vector<16x128xf32>
    %c2_44 = arith.constant 2 : index
    %c0_45 = arith.constant 0 : index
    %45 = vector.load %arg8[%c2_44, %c0_45] : memref<18x128xf32, #tpu.memory_space<vmem>>, vector<16x128xf32>
    %46 = arith.truncf %45 : vector<16x128xf32> to vector<16x128xbf16>
    %c2_46 = arith.constant 2 : index
    %c0_47 = arith.constant 0 : index
    %c0_48 = arith.constant 0 : index
    %47 = vector.load %arg4[%c2_46, %c0_47, %c0_48] : memref<3x128x128xbf16, #tpu.memory_space<vmem>>, vector<1x128x128xbf16>
    %48 = vector.shape_cast %47 : vector<1x128x128xbf16> to vector<128x128xbf16>
    %cst_49 = arith.constant dense<0.000000e+00> : vector<16x128xf32>
    %49 = tpu.matmul %46, %48, %cst_49 {dimension_numbers = #tpu.dot_dimension_numbers<[1], [0], [0], [1], [0, 0, 1, 1], [], []>} : vector<16x128xbf16>, vector<128x128xbf16>, vector<16x128xf32> -> vector<16x128xf32>
    %50 = arith.addf %44, %49 : vector<16x128xf32>
    %c0_50 = arith.constant 0 : index
    %c0_51 = arith.constant 0 : index
    %51 = vector.load %arg5[%c0_50, %c0_51] : memref<1x128xf32, #tpu.memory_space<vmem>>, vector<1x128xf32>
    %52 = vector.broadcast %51 : vector<1x128xf32> to vector<16x128xf32>
    %53 = arith.addf %50, %52 : vector<16x128xf32>
    %cst_52 = arith.constant 0.000000e+00 : f32
    %54 = vector.broadcast %cst_52 : f32 to vector<16x128xf32>
    %55 = arith.maximumf %53, %54 : vector<16x128xf32>
    %c0_53 = arith.constant 0 : index
    %c0_54 = arith.constant 0 : index
    %c0_55 = arith.constant 0 : index
    %56 = vector.load %arg6[%c0_53, %c0_54, %c0_55] : memref<1x16x128xf32, #tpu.memory_space<vmem>>, vector<1x16x128xf32>
    %57 = vector.shape_cast %56 : vector<1x16x128xf32> to vector<16x128xf32>
    %58 = vector.shape_cast %55 : vector<16x128xf32> to vector<1x16x128xf32>
    tpu.vector_store %arg6[%c0_53, %c0_54, %c0_55], %58 {strides = array<i32>} : memref<1x16x128xf32, #tpu.memory_space<vmem>>, vector<1x16x128xf32>,
    return
  }
  func.func @transform_0(%arg0: i32) -> (i32, i32, i32) {
    %c0_i32 = arith.constant 0 : i32
    %c0_i32_0 = arith.constant 0 : i32
    %c0_i32_1 = arith.constant 0 : i32
    return %arg0, %c0_i32, %c0_i32_0 : i32, i32, i32
  }
  func.func @transform_1(%arg0: i32) -> (i32, i32, i32) {
    %c0_i32 = arith.constant 0 : i32
    %c0_i32_0 = arith.constant 0 : i32
    %c0_i32_1 = arith.constant 0 : i32
    %c0_i32_2 = arith.constant 0 : i32
    return %c0_i32, %c0_i32_0, %c0_i32_1 : i32, i32, i32
  }
  func.func @transform_2(%arg0: i32) -> (i32, i32) {
    %c0_i32 = arith.constant 0 : i32
    %c0_i32_0 = arith.constant 0 : i32
    %c0_i32_1 = arith.constant 0 : i32
    return %c0_i32, %c0_i32_0 : i32, i32
  }
  func.func @transform_3(%arg0: i32) -> (i32, i32, i32) {
    %c0_i32 = arith.constant 0 : i32
    %c0_i32_0 = arith.constant 0 : i32
    %c0_i32_1 = arith.constant 0 : i32
    %c0_i32_2 = arith.constant 0 : i32
    return %c0_i32, %c0_i32_0, %c0_i32_1 : i32, i32, i32
  }
  func.func @transform_4(%arg0: i32) -> (i32, i32) {
    %c0_i32 = arith.constant 0 : i32
    %c0_i32_0 = arith.constant 0 : i32
    %c0_i32_1 = arith.constant 0 : i32
    return %c0_i32, %c0_i32_0 : i32, i32
  }
  func.func @transform_5(%arg0: i32) -> (i32, i32, i32) {
    %c0_i32 = arith.constant 0 : i32
    %c0_i32_0 = arith.constant 0 : i32
    %c0_i32_1 = arith.constant 0 : i32
    return %arg0, %c0_i32, %c0_i32_0 : i32, i32, i32
  }
}

</mosaic_0001>

<llo_original>
// kernel: tpu_custom_call.1
$region0: #{tpu_custom_call.1}
  #allocation0 [shape = 'u32[]', space=smem, size = 0x4, offset = 0x4, fixed_abs, tag = 'smem constant byte address 0x4 - core index']
  #allocation1 [shape = 'u32[144,128]{1,0:T(1,128)}', space=vmem, size = 0x12000, scoped, tag = 'internal scratch']
  #allocation2 [shape = 'f32[18,64]{1,0:T(8,128)}', space=vmem, size = 0x3000, scoped, tag = 'scratch operand']
  #allocation3 [shape = 'f32[18,128]{1,0:T(8,128)}', space=vmem, size = 0x3000, scoped, tag = 'scratch operand']
  %s0 = inlined_call_operand.hbm [shape: f32[2,16,64], index: 0, kind: input, shape index: {}]
  %s1 = inlined_call_operand.hbm [shape: bf16[3,64,128], index: 1, kind: input, shape index: {}]
  %s2 = inlined_call_operand.vmem [shape: f32[1,128], index: 2, kind: input, shape index: {}]
  %s3 = inlined_call_operand.hbm [shape: bf16[3,128,128], index: 3, kind: input, shape index: {}]
  %s4 = inlined_call_operand.vmem [shape: f32[1,128], index: 4, kind: input, shape index: {}]
  %s5 = inlined_call_operand.hbm [shape: f32[2,16,128], index: 5, kind: output, shape index: {}]
  %s6 = sld [smem:[#allocation0]]
  $region65: #{tpu_custom_call.1} parent=0
    _
  %s8 = ssub.s32 1, %s6
  %s9 = scalar_select 0, %s8, %s6
  $region1: #{tpu_custom_call.1} parent=0
    #allocation4 [shape = 'u8[16384]{0}', space=vmem, size = 0x4000, scoped, tag = 'input window, operand 0']
    #allocation5 [shape = 's32[2]{0}', space=sflag, size = 0x8, scoped, tag = 'scoped memory for tpu_custom_call.1']
    #allocation6 [shape = 's32[2]{0}', space=sflag, size = 0x8, scoped, tag = 'scoped memory for tpu_custom_call.1']
    #allocation7 [shape = 'u8[49152]{0}', space=vmem, size = 0xc000, scoped, tag = 'input window, operand 1, single buffered']
    #allocation8 [shape = 's32[1]{0}', space=sflag, size = 0x4, scoped, tag = 'scoped memory for tpu_custom_call.1']
    #allocation9 [shape = 'u8[98304]{0}', space=vmem, size = 0x18000, scoped, tag = 'input window, operand 3, single buffered']
    #allocation10 [shape = 'u8[16384]{0}', space=vmem, size = 0x4000, scoped, tag = 'output window, operand 0']
    %10 = vsyncpa [#allocation5], 0
    %s11 = scalar_lea.sflag [#allocation5], 1
    %12 = vsyncpa %s11, 0
    %13 = vsyncpa [#allocation8], 0
    %14 = vsyncpa [#allocation6], 0
    %s15 = scalar_lea.sflag [#allocation6], 1
    %16 = vsyncpa %s15, 0
    loop: start=0, step=1, limit=4
    $region2: #{tpu_custom_call.1} parent=1 // loop_pre_header
      _
    $region3: #{tpu_custom_call.1} parent=1 // loop_header
      %s18 = sphi 0, %s22
      %p19 = scmp.ge.s32.totalorder %s18, 4
      %s28 = sphi 0, %s30
      %s31 = sphi 0, %s28
      %s32 = sphi 0, %s31
      %s48 = sphi 0, %s32
      %s52 = sphi 0, %s52
      %s54 = sphi 0, %s52
      %s55 = sphi 0, %s54
      %s69 = sphi 0, %s55
      %s73 = sphi 0, %s73
      %s75 = sphi 0, %s73
      %s76 = sphi 0, %s75
      %s90 = sphi 0, %s76
      %s94 = sphi 0, %s94
      %s96 = sphi 0, %s94
      %s97 = sphi 0, %s96
      %s111 = sphi 0, %s97
      %s115 = sphi 0, %s115
      %s117 = sphi 0, %s115
      %s118 = sphi 0, %s117
      %s132 = sphi 0, %s118
      %s138 = sphi 0, %s140
      %s141 = sphi 0, %s138
      %s142 = sphi 0, %s141
      %s158 = sphi 0, %s142
    $region4: #{tpu_custom_call.1} parent=1 // loop_header_branch
      %21 = sbr.rel (%p19) target = $region8
    $region5: #{tpu_custom_call.1} parent=1 // loop_body
      %s23 = ssub.s32 %s18, 1
      %s24 = ssub.s32 %s18, 2
      %s25 = sadd.s32 %s18, 1
      %s26 = ssub.s32 %s18, %s25
      %p27 = scmp.eq.s32.totalorder %s26, 0
      %s29 = sadd.s32 %s28, 1
      %s30 = scalar_select %p27, %s28, %s29
      %p33 = pneg %p27
      %p34 = scmp.eq.s32.totalorder %s18, 1
      %p35 = por %p33, %p34
      %p36 = scmp.ne.s32.totalorder %s28, %s31
      %p37 = scmp.eq.s32.totalorder %s18, 0
      %p38 = por %p36, %p37
      %p39 = scmp.ne.s32.totalorder %s28, %s31
      %p40 = scmp.eq.s32.totalorder %s23, 1
      %p41 = por %p39, %p40
      %p42 = scmp.ne.s32.totalorder %s31, %s32
      %p43 = scmp.eq.s32.totalorder %s23, 0
      %p44 = por %p42, %p43
      %p45 = scmp.ne.s32.totalorder %s31, %s32
      %p46 = scmp.eq.s32.totalorder %s24, 1
      %p47 = por %p45, %p46
      %p49 = scmp.ne.s32.totalorder %s32, %s48
      %p50 = scmp.eq.s32.totalorder %s24, 0
      %p51 = por %p49, %p50
      %s53 = sadd.s32 %s52, 1
      %p56 = scmp.eq.s32.totalorder %s18, 1
      %p57 = scmp.ne.s32.totalorder %s52, %s54
      %p58 = scmp.eq.s32.totalorder %s18, 0
      %p59 = por %p57, %p58
      %p60 = scmp.ne.s32.totalorder %s52, %s54
      %p61 = scmp.eq.s32.totalorder %s23, 1
      %p62 = por %p60, %p61
      %p63 = scmp.ne.s32.totalorder %s54, %s55
      %p64 = scmp.eq.s32.totalorder %s23, 0
      %p65 = por %p63, %p64
      %p66 = scmp.ne.s32.totalorder %s54, %s55
      %p67 = scmp.eq.s32.totalorder %s24, 1
      %p68 = por %p66, %p67
      %p70 = scmp.ne.s32.totalorder %s55, %s69
      %p71 = scmp.eq.s32.totalorder %s24, 0
      %p72 = por %p70, %p71
      %s74 = sadd.s32 %s73, 1
      %p77 = scmp.eq.s32.totalorder %s18, 1
      %p78 = scmp.ne.s32.totalorder %s73, %s75
      %p79 = scmp.eq.s32.totalorder %s18, 0
      %p80 = por %p78, %p79
      %p81 = scmp.ne.s32.totalorder %s73, %s75
      %p82 = scmp.eq.s32.totalorder %s23, 1
      %p83 = por %p81, %p82
      %p84 = scmp.ne.s32.totalorder %s75, %s76
      %p85 = scmp.eq.s32.totalorder %s23, 0
      %p86 = por %p84, %p85
      %p87 = scmp.ne.s32.totalorder %s75, %s76
      %p88 = scmp.eq.s32.totalorder %s24, 1
      %p89 = por %p87, %p88
      %p91 = scmp.ne.s32.totalorder %s76, %s90
      %p92 = scmp.eq.s32.totalorder %s24, 0
      %p93 = por %p91, %p92
      %s95 = sadd.s32 %s94, 1
      %p98 = scmp.eq.s32.totalorder %s18, 1
      %p99 = scmp.ne.s32.totalorder %s94, %s96
      %p100 = scmp.eq.s32.totalorder %s18, 0
      %p101 = por %p99, %p100
      %p102 = scmp.ne.s32.totalorder %s94, %s96
      %p103 = scmp.eq.s32.totalorder %s23, 1
      %p104 = por %p102, %p103
      %p105 = scmp.ne.s32.totalorder %s96, %s97
      %p106 = scmp.eq.s32.totalorder %s23, 0
      %p107 = por %p105, %p106
      %p108 = scmp.ne.s32.totalorder %s96, %s97
      %p109 = scmp.eq.s32.totalorder %s24, 1
      %p110 = por %p108, %p109
      %p112 = scmp.ne.s32.totalorder %s97, %s111
      %p113 = scmp.eq.s32.totalorder %s24, 0
      %p114 = por %p112, %p113
      %s116 = sadd.s32 %s115, 1
      %p119 = scmp.eq.s32.totalorder %s18, 1
      %p120 = scmp.ne.s32.totalorder %s115, %s117
      %p121 = scmp.eq.s32.totalorder %s18, 0
      %p122 = por %p120, %p121
      %p123 = scmp.ne.s32.totalorder %s115, %s117
      %p124 = scmp.eq.s32.totalorder %s23, 1
      %p125 = por %p123, %p124
      %p126 = scmp.ne.s32.totalorder %s117, %s118
      %p127 = scmp.eq.s32.totalorder %s23, 0
      %p128 = por %p126, %p127
      %p129 = scmp.ne.s32.totalorder %s117, %s118
      %p130 = scmp.eq.s32.totalorder %s24, 1
      %p131 = por %p129, %p130
      %p133 = scmp.ne.s32.totalorder %s118, %s132
      %p134 = scmp.eq.s32.totalorder %s24, 0
      %p135 = por %p133, %p134
      %s136 = ssub.s32 %s18, %s25
      %p137 = scmp.eq.s32.totalorder %s136, 0
      %s139 = sadd.s32 %s138, 1
      %s140 = scalar_select %p137, %s138, %s139
      %p143 = pneg %p137
      %p144 = scmp.eq.s32.totalorder %s18, 1
      %p145 = por %p143, %p144
      %p146 = scmp.ne.s32.totalorder %s138, %s141
      %p147 = scmp.eq.s32.totalorder %s18, 0
      %p148 = por %p146, %p147
      %p149 = scmp.ne.s32.totalorder %s138, %s141
      %p150 = scmp.eq.s32.totalorder %s23, 1
      %p151 = por %p149, %p150
      %p152 = scmp.ne.s32.totalorder %s141, %s142
      %p153 = scmp.eq.s32.totalorder %s23, 0
      %p154 = por %p152, %p153
      %p155 = scmp.ne.s32.totalorder %s141, %s142
      %p156 = scmp.eq.s32.totalorder %s24, 1
      %p157 = por %p155, %p156
      %p159 = scmp.ne.s32.totalorder %s142, %s158
      %p160 = scmp.eq.s32.totalorder %s24, 0
      %p161 = por %p159, %p160
      %p162 = scmp.le.s32.totalorder 1, %s18
      %p163 = scmp.lt.s32.totalorder %s18, 3
      %p164 = pnand %p162, %p163
      %p165 = pneg %p164
      // Predicated region
      $region9: #{tpu_custom_call.1} parent=5 // pred_check
        _
      $region10: #{tpu_custom_call.1} parent=5 // pred_check_branch
        %167 = sbr.rel (%p164) target = $region12
      $region11: #{tpu_custom_call.1} parent=5 // pred_region
        %s168 = ssub.s32 %s18, 1
        // Predicated region
        $region13: #{tpu_custom_call.1} parent=11 // pred_check
          %p169 = pneg %p65
        $region14: #{tpu_custom_call.1} parent=11 // pred_check_branch
          %171 = sbr.rel (%p169) target = $region16
        $region15: #{tpu_custom_call.1} parent=11 // pred_region
          %s173 = ssub.s32 1536, 1536
          %174 = vsyncadd [#allocation8], %s173
          %s175 = sshll.u32 [#allocation7], 4
          %s176 = int_to_ptr.vmem [resolvable:$true] %s175
          %181 = dma.hbm_to_vmem [thread:$0]  %s1, 1536, %s176, [#allocation8], 64, 64, 4
        $region16: #{tpu_custom_call.1} parent=11 // pred_fallthru
          _
        // Predicated region
        $region17: #{tpu_custom_call.1} parent=11 // pred_check
          %p182 = pneg %p86
        $region18: #{tpu_custom_call.1} parent=11 // pred_check_branch
          %184 = sbr.rel (%p182) target = $region20
        $region19: #{tpu_custom_call.1} parent=11 // pred_region
          _
        $region20: #{tpu_custom_call.1} parent=11 // pred_fallthru
          _
        // Predicated region
        $region21: #{tpu_custom_call.1} parent=11 // pred_check
          %p185 = pneg %p107
        $region22: #{tpu_custom_call.1} parent=11 // pred_check_branch
          %187 = sbr.rel (%p185) target = $region24
        $region23: #{tpu_custom_call.1} parent=11 // pred_region
          %s189 = ssub.s32 3072, 3072
          %190 = vsyncadd [#allocation8], %s189
          %s191 = sshll.u32 [#allocation9], 4
          %s192 = int_to_ptr.vmem [resolvable:$true] %s191
          %197 = dma.hbm_to_vmem [thread:$0]  %s3, 3072, %s192, [#allocation8], 64, 64, 4
        $region24: #{tpu_custom_call.1} parent=11 // pred_fallthru
          _
        // Predicated region
        $region25: #{tpu_custom_call.1} parent=11 // pred_check
          %p198 = pneg %p128
        $region26: #{tpu_custom_call.1} parent=11 // pred_check_branch
          %200 = sbr.rel (%p198) target = $region28
        $region27: #{tpu_custom_call.1} parent=11 // pred_region
          _
        $region28: #{tpu_custom_call.1} parent=11 // pred_fallthru
          _
      $region12: #{tpu_custom_call.1} parent=5 // pred_fallthru
        _
      %p201 = scmp.lt.s32.totalorder %s18, 2
      // Predicated region
      $region29: #{tpu_custom_call.1} parent=5 // pred_check
        %p202 = pneg %p201
      $region30: #{tpu_custom_call.1} parent=5 // pred_check_branch
        %204 = sbr.rel (%p202) target = $region32
      $region31: #{tpu_custom_call.1} parent=5 // pred_region
        // Predicated region
        $region33: #{tpu_custom_call.1} parent=31 // pred_check
          %p205 = pneg %p38
        $region34: #{tpu_custom_call.1} parent=31 // pred_check_branch
          %207 = sbr.rel (%p205) target = $region36
        $region35: #{tpu_custom_call.1} parent=31 // pred_region
          %s208 = sand.u32 %s28, 1
          %s209 = scalar_lea.sflag [#allocation5], %s208
          %s210 = sand.u32 %s28, 1
          %s211 = smul.addr %s210, 16
          %s212 = scalar_lea.vmem [#allocation4], %s211
          %s214 = ssub.s32 256, 256
          %215 = vsyncadd %s209, %s214
          %s216 = smul.addr %s18, 2
          %s217 = smul.addr %s216, 128
          %s218 = scalar_lea.hbm %s0, %s217
          %s219 = sshll.u32 %s212, 4
          %s220 = int_to_ptr.vmem [resolvable:$true] %s219
          %225 = dma.hbm_to_vmem [thread:$0]  %s218, 256, %s220, %s209, 128, 128, 8
        $region36: #{tpu_custom_call.1} parent=31 // pred_fallthru
          _
      $region32: #{tpu_custom_call.1} parent=5 // pred_fallthru
        _
      %p226 = scmp.le.s32.totalorder 1, %s18
      %p227 = scmp.lt.s32.totalorder %s18, 3
      %p228 = pnand %p226, %p227
      %p229 = pneg %p228
      // Predicated region
      $region37: #{tpu_custom_call.1} parent=5 // pred_check
        _
      $region38: #{tpu_custom_call.1} parent=5 // pred_check_branch
        %231 = sbr.rel (%p228) target = $region40
      $region39: #{tpu_custom_call.1} parent=5 // pred_region
        %s232 = ssub.s32 %s18, 1
        %s233 = sand.u32 %s31, 1
        %s234 = scalar_lea.sflag [#allocation5], %s233
        %s235 = sand.u32 %s31, 1
        %s236 = smul.addr %s235, 16
        %s237 = scalar_lea.vmem [#allocation4], %s236
        // Predicated region
        $region41: #{tpu_custom_call.1} parent=39 // pred_check
          %p238 = pneg %p44
        $region42: #{tpu_custom_call.1} parent=39 // pred_check_branch
          %240 = sbr.rel (%p238) target = $region44
        $region43: #{tpu_custom_call.1} parent=39 // pred_region
          %241 = dma.done %s234, 256
        $region44: #{tpu_custom_call.1} parent=39 // pred_fallthru
          _
        // Predicated region
        $region45: #{tpu_custom_call.1} parent=39 // pred_check
          %p242 = pneg %p65
        $region46: #{tpu_custom_call.1} parent=39 // pred_check_branch
          %244 = sbr.rel (%p242) target = $region48
        $region47: #{tpu_custom_call.1} parent=39 // pred_region
          %245 = dma.done [#allocation8], 1536
        $region48: #{tpu_custom_call.1} parent=39 // pred_fallthru
          _
        // Predicated region
        $region49: #{tpu_custom_call.1} parent=39 // pred_check
          %p246 = pneg %p107
        $region50: #{tpu_custom_call.1} parent=39 // pred_check_branch
          %248 = sbr.rel (%p246) target = $region52
        $region51: #{tpu_custom_call.1} parent=39 // pred_region
          %249 = dma.done [#allocation8], 3072
        $region52: #{tpu_custom_call.1} parent=39 // pred_fallthru
          _
        %s250 = sand.u32 %s31, 1
        %s251 = scalar_lea.sflag [#allocation5], %s250
        %s252 = sand.u32 %s31, 1
        %s253 = smul.addr %s252, 16
        %s254 = scalar_lea.vmem [#allocation4], %s253
        %p255 = pneg %p44
        %p256 = pneg %p41
        %p257 = pneg %p65
        %p258 = pneg %p62
        %p259 = pneg %p86
        %p260 = pneg %p83
        %p261 = pneg %p107
        %p262 = pneg %p104
        %p263 = pneg %p128
        %p264 = pneg %p125
        %p265 = pneg %p154
        %p266 = pneg %p151
        %s267 = sand.u32 %s141, 1
        %s268 = scalar_lea.sflag [#allocation6], %s267
        %s269 = sand.u32 %s141, 1
        %s270 = smul.addr %s269, 16
        %s271 = scalar_lea.vmem [#allocation10], %s270
        %vm273 = vcmask 523264
        %274 = vst.msk [vmem:[#allocation2] sm:$0xff] %vm273, 0.0
        %275 = vst.msk [vmem:[#allocation2 + $0x8] sm:$0xff] %vm273, 0.0
        %vm276 = vcmask 517120
        %277 = vst.msk [vmem:[#allocation2 + $0x10] sm:$0x3] %vm276, 0.0
        %v278 = vld [vmem:[%s237] sm:$0xff]
        %v279 = vld [vmem:[%s237 + $0x8] sm:$0xff]
        %280 = vst.msk [vmem:[#allocation2 + $0x1] sm:$0xff] %vm273, %v278
        %281 = vst.msk [vmem:[#allocation2 + $0x9] sm:$0xff] %vm273, %v279
        %v282 = vld [vmem:[#allocation2] sm:$0xff]
        %v283 = vld [vmem:[#allocation2 + $0x8] sm:$0xff]
        %v284 = vpack.c.bf16 %v283, %v282
        %v285 = vld [vmem:[#allocation7] sm:$0xf]
        %v286 = vld [vmem:[#allocation7 + $0x4] sm:$0xf]
        %v287 = vld [vmem:[#allocation7 + $0x8] sm:$0xf]
        %v288 = vld [vmem:[#allocation7 + $0xc] sm:$0xf]
        %v289 = vld [vmem:[#allocation7 + $0x10] sm:$0xf]
        %v290 = vld [vmem:[#allocation7 + $0x14] sm:$0xf]
        %v291 = vld [vmem:[#allocation7 + $0x18] sm:$0xf]
        %v292 = vld [vmem:[#allocation7 + $0x1c] sm:$0xf]
        %v293 = vld [vmem:[#allocation2 + $0x1] sm:$0xff]
        %v294 = vld [vmem:[#allocation2 + $0x9] sm:$0xff]
        %v295 = vpack.c.bf16 %v294, %v293
        %s296 = scalar_lea.vmem [#allocation7], 32
        %v297 = vld [vmem:[%s296] sm:$0xf]
        %v298 = vld [vmem:[%s296 + $0x4] sm:$0xf]
        %v299 = vld [vmem:[%s296 + $0x8] sm:$0xf]
        %v300 = vld [vmem:[%s296 + $0xc] sm:$0xf]
        %v301 = vld [vmem:[%s296 + $0x10] sm:$0xf]
        %v302 = vld [vmem:[%s296 + $0x14] sm:$0xf]
        %v303 = vld [vmem:[%s296 + $0x18] sm:$0xf]
        %v304 = vld [vmem:[%s296 + $0x1c] sm:$0xf]
        %v313 = vunpack.c.l.b16 %v297
        %v314 = vunpack.c.l.b16 %v298
        %v315 = vunpack.c.l.b16 %v299
        %v316 = vunpack.c.l.b16 %v300
        %v317 = vunpack.c.l.b16 %v301
        %v318 = vunpack.c.l.b16 %v302
        %v319 = vunpack.c.l.b16 %v303
        %v320 = vunpack.c.l.b16 %v304
        %v321 = vpack.c.b16 %v314, %v313
        %v322 = vpack.c.b16 %v316, %v315
        %v323 = vpack.c.b16 %v318, %v317
        %v324 = vpack.c.b16 %v320, %v319
        %v330 = vsel %vm273, %v295, 0
        %332 = vmatprep.subr.bf16.mxu0 0
        %333 = vmatpush1.bf16.msra.mxu0 %v321
        %334 = vmatprep.subr.bf16.mxu0 0
        %335 = vmatpush1.bf16.msra.mxu0 %v322
        %336 = vmatprep.subr.bf16.mxu0 0
        %337 = vmatpush1.bf16.msra.mxu0 %v323
        %338 = vmatprep.subr.bf16.mxu0 0
        %339 = vmatpush1.bf16.msra.mxu0 %v324
        %340 = vmatprep.subr.bf16.mxu0 0
        %341 = vmatpush1.bf16.msra.mxu0 0
        %342 = vmatprep.subr.bf16.mxu0 0
        %343 = vmatpush1.bf16.msra.mxu0 0
        %344 = vmatprep.subr.bf16.mxu0 0
        %345 = vmatpush1.bf16.msra.mxu0 0
        %346 = vmatprep.subr.bf16.mxu0 0
        %347 = vmatpush1.bf16.msra.mxu0 0
        %348 = vmatprep.subr.bf16.mxu0 0
        %349 = vmatpush1.bf16.msra.mxu0 0
        %350 = vmatprep.subr.bf16.mxu0 0
        %351 = vmatpush1.bf16.msra.mxu0 0
        %352 = vmatprep.subr.bf16.mxu0 0
        %353 = vmatpush1.bf16.msra.mxu0 0
        %354 = vmatprep.subr.bf16.mxu0 0
        %355 = vmatpush1.bf16.msra.mxu0 0
        %356 = vmatprep.subr.bf16.mxu0 0
        %357 = vmatpush1.bf16.msra.mxu0 0
        %358 = vmatprep.subr.bf16.mxu0 0
        %359 = vmatpush1.bf16.msra.mxu0 0
        %360 = vmatprep.subr.bf16.mxu0 0
        %361 = vmatpush1.bf16.msra.mxu0 0
        %362 = vmatprep.subr.bf16.mxu0 0
        %363 = vmatpush1.bf16.msra.mxu0 0
        %364 = vmatprep.mubr.bf16.mxu0 0
        %365 = vmatmul.mubr.bf16.gmra.mrb[0].mxu0 %v330
        %v366 = vpop.f32.mrb[0].mxu0
        %v367 = vadd.f32 0.0, %v366
        %v368 = vpop.f32.mrb[0].mxu0
        %v369 = vpop.f32.mrb[0].mxu0
        %v370 = vadd.f32 0.0, %v369
        %v371 = vpop.f32.mrb[0].mxu0
        %372 = vdwg.mxu0
        %v381 = vunpack.c.l.b16 %v285
        %v382 = vunpack.c.l.b16 %v286
        %v383 = vunpack.c.l.b16 %v287
        %v384 = vunpack.c.l.b16 %v288
        %v385 = vunpack.c.l.b16 %v289
        %v386 = vunpack.c.l.b16 %v290
        %v387 = vunpack.c.l.b16 %v291
        %v388 = vunpack.c.l.b16 %v292
        %v389 = vpack.c.b16 %v382, %v381
        %v390 = vpack.c.b16 %v384, %v383
        %v391 = vpack.c.b16 %v386, %v385
        %v392 = vpack.c.b16 %v388, %v387
        %v398 = vsel %vm273, %v284, 0
        %400 = vmatprep.subr.bf16.mxu0 0
        %401 = vmatpush1.bf16.msra.mxu0 %v389
        %402 = vmatprep.subr.bf16.mxu0 0
        %403 = vmatpush1.bf16.msra.mxu0 %v390
        %404 = vmatprep.subr.bf16.mxu0 0
        %405 = vmatpush1.bf16.msra.mxu0 %v391
        %406 = vmatprep.subr.bf16.mxu0 0
        %407 = vmatpush1.bf16.msra.mxu0 %v392
        %408 = vmatprep.subr.bf16.mxu0 0
        %409 = vmatpush1.bf16.msra.mxu0 0
        %410 = vmatprep.subr.bf16.mxu0 0
        %411 = vmatpush1.bf16.msra.mxu0 0
        %412 = vmatprep.subr.bf16.mxu0 0
        %413 = vmatpush1.bf16.msra.mxu0 0
        %414 = vmatprep.subr.bf16.mxu0 0
        %415 = vmatpush1.bf16.msra.mxu0 0
        %416 = vmatprep.subr.bf16.mxu0 0
        %417 = vmatpush1.bf16.msra.mxu0 0
        %418 = vmatprep.subr.bf16.mxu0 0
        %419 = vmatpush1.bf16.msra.mxu0 0
        %420 = vmatprep.subr.bf16.mxu0 0
        %421 = vmatpush1.bf16.msra.mxu0 0
        %422 = vmatprep.subr.bf16.mxu0 0
        %423 = vmatpush1.bf16.msra.mxu0 0
        %424 = vmatprep.subr.bf16.mxu0 0
        %425 = vmatpush1.bf16.msra.mxu0 0
        %426 = vmatprep.subr.bf16.mxu0 0
        %427 = vmatpush1.bf16.msra.mxu0 0
        %428 = vmatprep.subr.bf16.mxu0 0
        %429 = vmatpush1.bf16.msra.mxu0 0
        %430 = vmatprep.subr.bf16.mxu0 0
        %431 = vmatpush1.bf16.msra.mxu0 0
        %432 = vmatprep.mubr.bf16.mxu0 0
        %433 = vmatmul.mubr.bf16.gmra.mrb[0].mxu0 %v398
        %v434 = vpop.f32.mrb[0].mxu0
        %v435 = vadd.f32 %v367, %v434
        %v436 = vpop.f32.mrb[0].mxu0
        %v437 = vpop.f32.mrb[0].mxu0
        %v438 = vadd.f32 %v370, %v437
        %v439 = vpop.f32.mrb[0].mxu0
        %440 = vdwg.mxu0
        %v441 = vld [vmem:[#allocation2 + $0x2] sm:$0xff]
        %v442 = vld [vmem:[#allocation2 + $0xa] sm:$0xff]
        %v443 = vpack.c.bf16 %v442, %v441
        %s444 = scalar_lea.vmem [#allocation7], 64
        %v445 = vld [vmem:[%s444] sm:$0xf]
        %v446 = vld [vmem:[%s444 + $0x4] sm:$0xf]
        %v447 = vld [vmem:[%s444 + $0x8] sm:$0xf]
        %v448 = vld [vmem:[%s444 + $0xc] sm:$0xf]
        %v449 = vld [vmem:[%s444 + $0x10] sm:$0xf]
        %v450 = vld [vmem:[%s444 + $0x14] sm:$0xf]
        %v451 = vld [vmem:[%s444 + $0x18] sm:$0xf]
        %v452 = vld [vmem:[%s444 + $0x1c] sm:$0xf]
        %v461 = vunpack.c.l.b16 %v445
        %v462 = vunpack.c.l.b16 %v446
        %v463 = vunpack.c.l.b16 %v447
        %v464 = vunpack.c.l.b16 %v448
        %v465 = vunpack.c.l.b16 %v449
        %v466 = vunpack.c.l.b16 %v450
        %v467 = vunpack.c.l.b16 %v451
        %v468 = vunpack.c.l.b16 %v452
        %v469 = vpack.c.b16 %v462, %v461
        %v470 = vpack.c.b16 %v464, %v463
        %v471 = vpack.c.b16 %v466, %v465
        %v472 = vpack.c.b16 %v468, %v467
        %v478 = vsel %vm273, %v443, 0
        %480 = vmatprep.subr.bf16.mxu0 0
        %481 = vmatpush1.bf16.msra.mxu0 %v469
        %482 = vmatprep.subr.bf16.mxu0 0
        %483 = vmatpush1.bf16.msra.mxu0 %v470
        %484 = vmatprep.subr.bf16.mxu0 0
        %485 = vmatpush1.bf16.msra.mxu0 %v471
        %486 = vmatprep.subr.bf16.mxu0 0
        %487 = vmatpush1.bf16.msra.mxu0 %v472
        %488 = vmatprep.subr.bf16.mxu0 0
        %489 = vmatpush1.bf16.msra.mxu0 0
        %490 = vmatprep.subr.bf16.mxu0 0
        %491 = vmatpush1.bf16.msra.mxu0 0
        %492 = vmatprep.subr.bf16.mxu0 0
        %493 = vmatpush1.bf16.msra.mxu0 0
        %494 = vmatprep.subr.bf16.mxu0 0
        %495 = vmatpush1.bf16.msra.mxu0 0
        %496 = vmatprep.subr.bf16.mxu0 0
        %497 = vmatpush1.bf16.msra.mxu0 0
        %498 = vmatprep.subr.bf16.mxu0 0
        %499 = vmatpush1.bf16.msra.mxu0 0
        %500 = vmatprep.subr.bf16.mxu0 0
        %501 = vmatpush1.bf16.msra.mxu0 0
        %502 = vmatprep.subr.bf16.mxu0 0
        %503 = vmatpush1.bf16.msra.mxu0 0
        %504 = vmatprep.subr.bf16.mxu0 0
        %505 = vmatpush1.bf16.msra.mxu0 0
        %506 = vmatprep.subr.bf16.mxu0 0
        %507 = vmatpush1.bf16.msra.mxu0 0
        %508 = vmatprep.subr.bf16.mxu0 0
        %509 = vmatpush1.bf16.msra.mxu0 0
        %510 = vmatprep.subr.bf16.mxu0 0
        %511 = vmatpush1.bf16.msra.mxu0 0
        %512 = vmatprep.mubr.bf16.mxu0 0
        %513 = vmatmul.mubr.bf16.gmra.mrb[0].mxu0 %v478
        %v514 = vpop.f32.mrb[0].mxu0
        %v515 = vadd.f32 0.0, %v514
        %v516 = vpop.f32.mrb[0].mxu0
        %v517 = vpop.f32.mrb[0].mxu0
        %v518 = vadd.f32 0.0, %v517
        %v519 = vpop.f32.mrb[0].mxu0
        %520 = vdwg.mxu0
        %v521 = vadd.f32 %v435, %v515
        %v522 = vadd.f32 %v438, %v518
        %v523 = vld [vmem:[%s2] sm:$0x1]
        %v525 = vlaneseq
        %v526 = vshrl.u32 %v525, 7
        %v527 = vsub.s32 0, %v526
        %v528 = vrot.slane %v523, %v527
        %v530 = vadd.f32 %v521, %v528
        %v531 = vadd.f32 %v522, %v528
        %v532 = vmax.f32 %v530, 0.0
        %v533 = vmax.f32 %v531, 0.0
        %534 = vst [vmem:[#allocation3] sm:$0xff] 0.0
        %535 = vst [vmem:[#allocation3 + $0x8] sm:$0xff] 0.0
        %536 = vst [vmem:[#allocation3 + $0x10] sm:$0x3] 0.0
        %537 = vst [vmem:[#allocation3 + $0x1] sm:$0xff] %v532
        %538 = vst [vmem:[#allocation3 + $0x9] sm:$0xff] %v533
        %v539 = vld [vmem:[#allocation3] sm:$0xff]
        %v540 = vld [vmem:[#allocation3 + $0x8] sm:$0xff]
        %v541 = vpack.c.bf16 %v540, %v539
        %v542 = vld [vmem:[#allocation9] sm:$0xf]
        %v543 = vld [vmem:[#allocation9 + $0x4] sm:$0xf]
        %v544 = vld [vmem:[#allocation9 + $0x8] sm:$0xf]
        %v545 = vld [vmem:[#allocation9 + $0xc] sm:$0xf]
        %v546 = vld [vmem:[#allocation9 + $0x10] sm:$0xf]
        %v547 = vld [vmem:[#allocation9 + $0x14] sm:$0xf]
        %v548 = vld [vmem:[#allocation9 + $0x18] sm:$0xf]
        %v549 = vld [vmem:[#allocation9 + $0x1c] sm:$0xf]
        %v550 = vld [vmem:[#allocation9 + $0x20] sm:$0xf]
        %v551 = vld [vmem:[#allocation9 + $0x24] sm:$0xf]
        %v552 = vld [vmem:[#allocation9 + $0x28] sm:$0xf]
        %v553 = vld [vmem:[#allocation9 + $0x2c] sm:$0xf]
        %v554 = vld [vmem:[#allocation9 + $0x30] sm:$0xf]
        %v555 = vld [vmem:[#allocation9 + $0x34] sm:$0xf]
        %v556 = vld [vmem:[#allocation9 + $0x38] sm:$0xf]
        %v557 = vld [vmem:[#allocation9 + $0x3c] sm:$0xf]
        %v558 = vld [vmem:[#allocation3 + $0x1] sm:$0xff]
        %v559 = vld [vmem:[#allocation3 + $0x9] sm:$0xff]
        %v560 = vpack.c.bf16 %v559, %v558
        %s561 = scalar_lea.vmem [#allocation9], 64
        %v562 = vld [vmem:[%s561] sm:$0xf]
        %v563 = vld [vmem:[%s561 + $0x4] sm:$0xf]
        %v564 = vld [vmem:[%s561 + $0x8] sm:$0xf]
        %v565 = vld [vmem:[%s561 + $0xc] sm:$0xf]
        %v566 = vld [vmem:[%s561 + $0x10] sm:$0xf]
        %v567 = vld [vmem:[%s561 + $0x14] sm:$0xf]
        %v568 = vld [vmem:[%s561 + $0x18] sm:$0xf]
        %v569 = vld [vmem:[%s561 + $0x1c] sm:$0xf]
        %v570 = vld [vmem:[%s561 + $0x20] sm:$0xf]
        %v571 = vld [vmem:[%s561 + $0x24] sm:$0xf]
        %v572 = vld [vmem:[%s561 + $0x28] sm:$0xf]
        %v573 = vld [vmem:[%s561 + $0x2c] sm:$0xf]
        %v574 = vld [vmem:[%s561 + $0x30] sm:$0xf]
        %v575 = vld [vmem:[%s561 + $0x34] sm:$0xf]
        %v576 = vld [vmem:[%s561 + $0x38] sm:$0xf]
        %v577 = vld [vmem:[%s561 + $0x3c] sm:$0xf]
        %v594 = vunpack.c.l.b16 %v562
        %v595 = vunpack.c.l.b16 %v563
        %v596 = vunpack.c.l.b16 %v564
        %v597 = vunpack.c.l.b16 %v565
        %v598 = vunpack.c.l.b16 %v566
        %v599 = vunpack.c.l.b16 %v567
        %v600 = vunpack.c.l.b16 %v568
        %v601 = vunpack.c.l.b16 %v569
        %v602 = vunpack.c.l.b16 %v570
        %v603 = vunpack.c.l.b16 %v571
        %v604 = vunpack.c.l.b16 %v572
        %v605 = vunpack.c.l.b16 %v573
        %v606 = vunpack.c.l.b16 %v574
        %v607 = vunpack.c.l.b16 %v575
        %v608 = vunpack.c.l.b16 %v576
        %v609 = vunpack.c.l.b16 %v577
        %v610 = vpack.c.b16 %v595, %v594
        %v611 = vpack.c.b16 %v597, %v596
        %v612 = vpack.c.b16 %v599, %v598
        %v613 = vpack.c.b16 %v601, %v600
        %v614 = vpack.c.b16 %v603, %v602
        %v615 = vpack.c.b16 %v605, %v604
        %v616 = vpack.c.b16 %v607, %v606
        %v617 = vpack.c.b16 %v609, %v608
        %626 = vmatprep.subr.bf16.mxu0 0
        %627 = vmatpush1.bf16.msra.mxu0 %v610
        %628 = vmatprep.subr.bf16.mxu0 0
        %629 = vmatpush1.bf16.msra.mxu0 %v611
        %630 = vmatprep.subr.bf16.mxu0 0
        %631 = vmatpush1.bf16.msra.mxu0 %v612
        %632 = vmatprep.subr.bf16.mxu0 0
        %633 = vmatpush1.bf16.msra.mxu0 %v613
        %634 = vmatprep.subr.bf16.mxu0 0
        %635 = vmatpush1.bf16.msra.mxu0 %v614
        %636 = vmatprep.subr.bf16.mxu0 0
        %637 = vmatpush1.bf16.msra.mxu0 %v615
        %638 = vmatprep.subr.bf16.mxu0 0
        %639 = vmatpush1.bf16.msra.mxu0 %v616
        %640 = vmatprep.subr.bf16.mxu0 0
        %641 = vmatpush1.bf16.msra.mxu0 %v617
        %642 = vmatprep.subr.bf16.mxu0 0
        %643 = vmatpush1.bf16.msra.mxu0 0
        %644 = vmatprep.subr.bf16.mxu0 0
        %645 = vmatpush1.bf16.msra.mxu0 0
        %646 = vmatprep.subr.bf16.mxu0 0
        %647 = vmatpush1.bf16.msra.mxu0 0
        %648 = vmatprep.subr.bf16.mxu0 0
        %649 = vmatpush1.bf16.msra.mxu0 0
        %650 = vmatprep.subr.bf16.mxu0 0
        %651 = vmatpush1.bf16.msra.mxu0 0
        %652 = vmatprep.subr.bf16.mxu0 0
        %653 = vmatpush1.bf16.msra.mxu0 0
        %654 = vmatprep.subr.bf16.mxu0 0
        %655 = vmatpush1.bf16.msra.mxu0 0
        %656 = vmatprep.subr.bf16.mxu0 0
        %657 = vmatpush1.bf16.msra.mxu0 0
        %658 = vmatprep.mubr.bf16.mxu0 0
        %659 = vmatmul.mubr.bf16.gmra.mrb[0].mxu0 %v560
        %v660 = vpop.f32.mrb[0].mxu0
        %v661 = vadd.f32 0.0, %v660
        %v662 = vpop.f32.mrb[0].mxu0
        %v663 = vpop.f32.mrb[0].mxu0
        %v664 = vadd.f32 0.0, %v663
        %v665 = vpop.f32.mrb[0].mxu0
        %666 = vdwg.mxu0
        %v683 = vunpack.c.l.b16 %v542
        %v684 = vunpack.c.l.b16 %v543
        %v685 = vunpack.c.l.b16 %v544
        %v686 = vunpack.c.l.b16 %v545
        %v687 = vunpack.c.l.b16 %v546
        %v688 = vunpack.c.l.b16 %v547
        %v689 = vunpack.c.l.b16 %v548
        %v690 = vunpack.c.l.b16 %v549
        %v691 = vunpack.c.l.b16 %v550
        %v692 = vunpack.c.l.b16 %v551
        %v693 = vunpack.c.l.b16 %v552
        %v694 = vunpack.c.l.b16 %v553
        %v695 = vunpack.c.l.b16 %v554
        %v696 = vunpack.c.l.b16 %v555
        %v697 = vunpack.c.l.b16 %v556
        %v698 = vunpack.c.l.b16 %v557
        %v699 = vpack.c.b16 %v684, %v683
        %v700 = vpack.c.b16 %v686, %v685
        %v701 = vpack.c.b16 %v688, %v687
        %v702 = vpack.c.b16 %v690, %v689
        %v703 = vpack.c.b16 %v692, %v691
        %v704 = vpack.c.b16 %v694, %v693
        %v705 = vpack.c.b16 %v696, %v695
        %v706 = vpack.c.b16 %v698, %v697
        %715 = vmatprep.subr.bf16.mxu0 0
        %716 = vmatpush1.bf16.msra.mxu0 %v699
        %717 = vmatprep.subr.bf16.mxu0 0
        %718 = vmatpush1.bf16.msra.mxu0 %v700
        %719 = vmatprep.subr.bf16.mxu0 0
        %720 = vmatpush1.bf16.msra.mxu0 %v701
        %721 = vmatprep.subr.bf16.mxu0 0
        %722 = vmatpush1.bf16.msra.mxu0 %v702
        %723 = vmatprep.subr.bf16.mxu0 0
        %724 = vmatpush1.bf16.msra.mxu0 %v703
        %725 = vmatprep.subr.bf16.mxu0 0
        %726 = vmatpush1.bf16.msra.mxu0 %v704
        %727 = vmatprep.subr.bf16.mxu0 0
        %728 = vmatpush1.bf16.msra.mxu0 %v705
        %729 = vmatprep.subr.bf16.mxu0 0
        %730 = vmatpush1.bf16.msra.mxu0 %v706
        %731 = vmatprep.subr.bf16.mxu0 0
        %732 = vmatpush1.bf16.msra.mxu0 0
        %733 = vmatprep.subr.bf16.mxu0 0
        %734 = vmatpush1.bf16.msra.mxu0 0
        %735 = vmatprep.subr.bf16.mxu0 0
        %736 = vmatpush1.bf16.msra.mxu0 0
        %737 = vmatprep.subr.bf16.mxu0 0
        %738 = vmatpush1.bf16.msra.mxu0 0
        %739 = vmatprep.subr.bf16.mxu0 0
        %740 = vmatpush1.bf16.msra.mxu0 0
        %741 = vmatprep.subr.bf16.mxu0 0
        %742 = vmatpush1.bf16.msra.mxu0 0
        %743 = vmatprep.subr.bf16.mxu0 0
        %744 = vmatpush1.bf16.msra.mxu0 0
        %745 = vmatprep.subr.bf16.mxu0 0
        %746 = vmatpush1.bf16.msra.mxu0 0
        %747 = vmatprep.mubr.bf16.mxu0 0
        %748 = vmatmul.mubr.bf16.gmra.mrb[0].mxu0 %v541
        %v749 = vpop.f32.mrb[0].mxu0
        %v750 = vadd.f32 %v661, %v749
        %v751 = vpop.f32.mrb[0].mxu0
        %v752 = vpop.f32.mrb[0].mxu0
        %v753 = vadd.f32 %v664, %v752
        %v754 = vpop.f32.mrb[0].mxu0
        %755 = vdwg.mxu0
        %v756 = vld [vmem:[#allocation3 + $0x2] sm:$0xff]
        %v757 = vld [vmem:[#allocation3 + $0xa] sm:$0xff]
        %v758 = vpack.c.bf16 %v757, %v756
        %s759 = scalar_lea.vmem [#allocation9], 128
        %v760 = vld [vmem:[%s759] sm:$0xf]
        %v761 = vld [vmem:[%s759 + $0x4] sm:$0xf]
        %v762 = vld [vmem:[%s759 + $0x8] sm:$0xf]
        %v763 = vld [vmem:[%s759 + $0xc] sm:$0xf]
        %v764 = vld [vmem:[%s759 + $0x10] sm:$0xf]
        %v765 = vld [vmem:[%s759 + $0x14] sm:$0xf]
        %v766 = vld [vmem:[%s759 + $0x18] sm:$0xf]
        %v767 = vld [vmem:[%s759 + $0x1c] sm:$0xf]
        %v768 = vld [vmem:[%s759 + $0x20] sm:$0xf]
        %v769 = vld [vmem:[%s759 + $0x24] sm:$0xf]
        %v770 = vld [vmem:[%s759 + $0x28] sm:$0xf]
        %v771 = vld [vmem:[%s759 + $0x2c] sm:$0xf]
        %v772 = vld [vmem:[%s759 + $0x30] sm:$0xf]
        %v773 = vld [vmem:[%s759 + $0x34] sm:$0xf]
        %v774 = vld [vmem:[%s759 + $0x38] sm:$0xf]
        %v775 = vld [vmem:[%s759 + $0x3c] sm:$0xf]
        %v792 = vunpack.c.l.b16 %v760
        %v793 = vunpack.c.l.b16 %v761
        %v794 = vunpack.c.l.b16 %v762
        %v795 = vunpack.c.l.b16 %v763
        %v796 = vunpack.c.l.b16 %v764
        %v797 = vunpack.c.l.b16 %v765
        %v798 = vunpack.c.l.b16 %v766
        %v799 = vunpack.c.l.b16 %v767
        %v800 = vunpack.c.l.b16 %v768
        %v801 = vunpack.c.l.b16 %v769
        %v802 = vunpack.c.l.b16 %v770
        %v803 = vunpack.c.l.b16 %v771
        %v804 = vunpack.c.l.b16 %v772
        %v805 = vunpack.c.l.b16 %v773
        %v806 = vunpack.c.l.b16 %v774
        %v807 = vunpack.c.l.b16 %v775
        %v808 = vpack.c.b16 %v793, %v792
        %v809 = vpack.c.b16 %v795, %v794
        %v810 = vpack.c.b16 %v797, %v796
        %v811 = vpack.c.b16 %v799, %v798
        %v812 = vpack.c.b16 %v801, %v800
        %v813 = vpack.c.b16 %v803, %v802
        %v814 = vpack.c.b16 %v805, %v804
        %v815 = vpack.c.b16 %v807, %v806
        %824 = vmatprep.subr.bf16.mxu0 0
        %825 = vmatpush1.bf16.msra.mxu0 %v808
        %826 = vmatprep.subr.bf16.mxu0 0
        %827 = vmatpush1.bf16.msra.mxu0 %v809
        %828 = vmatprep.subr.bf16.mxu0 0
        %829 = vmatpush1.bf16.msra.mxu0 %v810
        %830 = vmatprep.subr.bf16.mxu0 0
        %831 = vmatpush1.bf16.msra.mxu0 %v811
        %832 = vmatprep.subr.bf16.mxu0 0
        %833 = vmatpush1.bf16.msra.mxu0 %v812
        %834 = vmatprep.subr.bf16.mxu0 0
        %835 = vmatpush1.bf16.msra.mxu0 %v813
        %836 = vmatprep.subr.bf16.mxu0 0
        %837 = vmatpush1.bf16.msra.mxu0 %v814
        %838 = vmatprep.subr.bf16.mxu0 0
        %839 = vmatpush1.bf16.msra.mxu0 %v815
        %840 = vmatprep.subr.bf16.mxu0 0
        %841 = vmatpush1.bf16.msra.mxu0 0
        %842 = vmatprep.subr.bf16.mxu0 0
        %843 = vmatpush1.bf16.msra.mxu0 0
        %844 = vmatprep.subr.bf16.mxu0 0
        %845 = vmatpush1.bf16.msra.mxu0 0
        %846 = vmatprep.subr.bf16.mxu0 0
        %847 = vmatpush1.bf16.msra.mxu0 0
        %848 = vmatprep.subr.bf16.mxu0 0
        %849 = vmatpush1.bf16.msra.mxu0 0
        %850 = vmatprep.subr.bf16.mxu0 0
        %851 = vmatpush1.bf16.msra.mxu0 0
        %852 = vmatprep.subr.bf16.mxu0 0
        %853 = vmatpush1.bf16.msra.mxu0 0
        %854 = vmatprep.subr.bf16.mxu0 0
        %855 = vmatpush1.bf16.msra.mxu0 0
        %856 = vmatprep.mubr.bf16.mxu0 0
        %857 = vmatmul.mubr.bf16.gmra.mrb[0].mxu0 %v758
        %v858 = vpop.f32.mrb[0].mxu0
        %v859 = vadd.f32 0.0, %v858
        %v860 = vpop.f32.mrb[0].mxu0
        %v861 = vpop.f32.mrb[0].mxu0
        %v862 = vadd.f32 0.0, %v861
        %v863 = vpop.f32.mrb[0].mxu0
        %864 = vdwg.mxu0
        %v865 = vadd.f32 %v750, %v859
        %v866 = vadd.f32 %v753, %v862
        %v867 = vld [vmem:[%s4] sm:$0x1]
        %v869 = vlaneseq
        %v870 = vshrl.u32 %v869, 7
        %v871 = vsub.s32 0, %v870
        %v872 = vrot.slane %v867, %v871
        %v874 = vadd.f32 %v865, %v872
        %v875 = vadd.f32 %v866, %v872
        %v876 = vmax.f32 %v874, 0.0
        %v877 = vmax.f32 %v875, 0.0
        %878 = vst [vmem:[%s271] sm:$0xff] %v876
        %879 = vst [vmem:[%s271 + $0x8] sm:$0xff] %v877
        %s880 = sand.u32 %s141, 1
        %s881 = scalar_lea.sflag [#allocation6], %s880
        %s882 = sand.u32 %s141, 1
        %s883 = smul.addr %s882, 16
        %s884 = scalar_lea.vmem [#allocation10], %s883
        // Predicated region
        $region53: #{tpu_custom_call.1} parent=39 // pred_check
          %p885 = pneg %p151
        $region54: #{tpu_custom_call.1} parent=39 // pred_check_branch
          %887 = sbr.rel (%p885) target = $region56
        $region55: #{tpu_custom_call.1} parent=39 // pred_region
          %s889 = ssub.s32 256, 256
          %890 = vsyncadd %s881, %s889
          %s891 = smul.addr %s23, 2
          %s892 = smul.addr %s891, 128
          %s893 = scalar_lea.hbm %s5, %s892
          %s894 = sshll.u32 %s884, 4
          %s895 = int_to_ptr.vmem [resolvable:$true] %s894
          %900 = dma.vmem_to_hbm [thread:$0]  %s895, 256, %s893, %s881, 128, 128, 8
        $region56: #{tpu_custom_call.1} parent=39 // pred_fallthru
          _
      $region40: #{tpu_custom_call.1} parent=5 // pred_fallthru
        _
      %p901 = scmp.le.s32.totalorder 2, %s18
      // Predicated region
      $region57: #{tpu_custom_call.1} parent=5 // pred_check
        %p902 = pneg %p901
      $region58: #{tpu_custom_call.1} parent=5 // pred_check_branch
        %904 = sbr.rel (%p902) target = $region60
      $region59: #{tpu_custom_call.1} parent=5 // pred_region
        %s905 = ssub.s32 %s18, 2
        // Predicated region
        $region61: #{tpu_custom_call.1} parent=59 // pred_check
          %p906 = pneg %p157
        $region62: #{tpu_custom_call.1} parent=59 // pred_check_branch
          %908 = sbr.rel (%p906) target = $region64
        $region63: #{tpu_custom_call.1} parent=59 // pred_region
          %s909 = sand.u32 %s142, 1
          %s910 = scalar_lea.sflag [#allocation6], %s909
          %s911 = sand.u32 %s142, 1
          %s912 = smul.addr %s911, 16
          %s913 = scalar_lea.vmem [#allocation10], %s912
          %914 = dma.done %s910, 256
        $region64: #{tpu_custom_call.1} parent=59 // pred_fallthru
          _
      $region60: #{tpu_custom_call.1} parent=5 // pred_fallthru
        _
    $region6: #{tpu_custom_call.1} parent=1 // loop_footer
      %s22 = sadd.s32 1, %s18
    $region7: #{tpu_custom_call.1} parent=1 // loop_footer_branch
      %17 = sbr.rel target = $region3
    $region8: #{tpu_custom_call.1} parent=1 // loop_exit
      _
    %915 = vsyncpa [#allocation5], 1
    %s916 = scalar_lea.sflag [#allocation5], 1
    %917 = vsyncpa %s916, 1
    %918 = vsyncpa [#allocation8], 1
    %919 = vsyncpa [#allocation6], 1
    %s920 = scalar_lea.sflag [#allocation6], 1
    %921 = vsyncpa %s920, 1

</llo_original>
